<compile_context>
chip_gen: v7x
topology: tpu7x:2x2x1
jax: 0.10.0
libtpu: 0.0.40
codegen_flags: <defaults>
</compile_context>

<pallas_src>
import functools

import jax
import jax.numpy as jnp
from jax.experimental import pallas as pl
from jax.experimental.pallas import tpu as pltpu

DEFAULT_MARGIN = 0.5


def _round_up(x, m):
    return ((x + m - 1) // m) * m


def _triplet_kernel(a_ref, p_ref, n_ref, al_ref, plb_ref, nlb_ref,
                    out_ref, acc_ref, *, margin, ragged_b, rows_last):
    b = pl.program_id(1)
    nb = pl.num_programs(1)

    @pl.when(b == 0)
    def _():
        acc_ref[...] = jnp.zeros_like(acc_ref)

    a = a_ref[...].astype(jnp.float32)
    p = p_ref[...].astype(jnp.float32)
    n = n_ref[...].astype(jnp.float32)
    al = al_ref[...].astype(jnp.float32)
    plb = plb_ref[...].astype(jnp.float32)
    nlb = nlb_ref[...].astype(jnp.float32)

    dp = a - p
    dn = a - n
    lp = al - plb
    ln_ = al - nlb

    # Fused elementwise combination; reductions come afterwards.
    t = dp * dp - dn * dn + margin * (ln_ * ln_ - lp * lp)

    acc_rows = acc_ref.shape[0]

    def _fold_rows(x):
        # (tb, td) -> (acc_rows, td) using only VALU vreg adds (no XLU reduce
        # on the hot path when acc_rows == 8).
        if acc_rows == 1:
            return jnp.sum(x, axis=0, keepdims=True)
        groups = x.shape[0] // acc_rows
        out = x[0:acc_rows, :]
        for i in range(1, groups):
            out = out + x[i * acc_rows:(i + 1) * acc_rows, :]
        return out

    if not ragged_b:
        acc_ref[...] += _fold_rows(t)
    else:
        is_last = b == nb - 1

        @pl.when(jnp.logical_not(is_last))
        def _():
            acc_ref[...] += _fold_rows(t)

        @pl.when(is_last)
        def _():
            # Select (not multiply) so NaN/Inf garbage in the partially-DMA'd
            # ragged rows cannot leak into the reduction.
            row = jax.lax.broadcasted_iota(jnp.int32, t.shape, 0)
            tm = jnp.where(row < rows_last, t, 0.0)
            acc_ref[...] += _fold_rows(tm)

    # Single cross-sublane reduce + relu only after the full B reduction.
    @pl.when(b == nb - 1)
    def _():
        out_ref[...] = jnp.maximum(
            jnp.sum(acc_ref[...], axis=0, keepdims=True), 0.0)


def triplet_loss_self(anchor, positive, negative,
                      anchor_label, positive_label, negative_label,
                      margin=DEFAULT_MARGIN, tile_b=512, tile_d=1024):
    """All inputs are (B, D) arrays of the same shape/dtype. Returns a scalar
    float32 loss equal to TripletLoss_self(margin).forward(...)."""
    B, D = anchor.shape
    itemsize = jnp.dtype(anchor.dtype).itemsize
    sublane = {4: 8, 2: 16, 1: 32}.get(itemsize, 8)

    # --- sublane (B) tile: dtype-aware multiple, or full dim when B is tiny.
    if B >= sublane:
        tb = min(int(tile_b), _round_up(B, sublane))
        tb = _round_up(tb, sublane)
    else:
        tb = B  # block == full array dim, allowed by the (8, 128) rule.

    # --- lane (D) tile: multiple of 128, or full dim when D < 128.  Keep at
    # least 2 blocks along the parallel D axis when possible so both v7x
    # TensorCores get work (a single extra grid step is noise on v5e/v6e).
    if D >= 128:
        td = min(int(tile_d), _round_up(D, 128))
        td = _round_up(td, 128)
        if pl.cdiv(D, td) < 2 and D > 128:
            td = max(128, _round_up(pl.cdiv(D, 2), 128))
    else:
        td = D

    nd = pl.cdiv(D, td)
    nb = pl.cdiv(B, tb)
    ragged_b = (B % tb) != 0
    rows_last = B - (nb - 1) * tb
    acc_rows = 8 if (tb >= 8 and tb % 8 == 0) else 1

    grid = (nd, nb)
    in_spec = pl.BlockSpec((tb, td), lambda d, b: (b, d))

    # VMEM budget: 6 double-buffered input streams + output + accumulator,
    # plus headroom; capped at 48 MiB so it is safe on v7x (64 MiB/TC) too.
    vmem_need = (6 * 2 * tb * td * itemsize    # input double-buffers
                 + 2 * td * 4                  # output double-buffer
                 + acc_rows * td * 4)          # accumulator scratch
    vmem_limit = int(min(max(vmem_need + (8 << 20), 32 << 20), 48 << 20))

    cost = pl.CostEstimate(
        flops=12 * B * D,
        transcendentals=0,
        bytes_accessed=6 * B * D * itemsize + 4 * D,
    )

    losses_row = pl.pallas_call(
        functools.partial(_triplet_kernel, margin=float(margin),
                          ragged_b=ragged_b, rows_last=rows_last),
        out_shape=jax.ShapeDtypeStruct((1, D), jnp.float32),
        grid_spec=pltpu.PrefetchScalarGridSpec(
            num_scalar_prefetch=0,
            grid=grid,
            in_specs=[in_spec] * 6,
            out_specs=pl.BlockSpec((1, td), lambda d, b: (0, d)),
            scratch_shapes=[pltpu.VMEM((acc_rows, td), jnp.float32)],
        ),
        compiler_params=pltpu.CompilerParams(
            dimension_semantics=("parallel", "arbitrary"),
            vmem_limit_bytes=vmem_limit,
        ),
        cost_estimate=cost,
    )(anchor, positive, negative, anchor_label, positive_label,
      negative_label)

    # Final mean over the D per-lane losses (ragged output lanes are never
    # written, and (1, D) only contains valid data).
    return jnp.sum(losses_row[0, :]) / jnp.float32(D)


def _reference(anchor, positive, negative, al, plb, nl, margin=DEFAULT_MARGIN):
    f = lambda x: x.astype(jnp.float32)
    d_pos = jnp.sum((f(anchor) - f(positive)) ** 2, axis=0)
    d_neg_a = jnp.sum((f(anchor) - f(negative)) ** 2, axis=0)
    l_ap = jnp.sum((f(al) - f(plb)) ** 2, axis=0)
    l_an = jnp.sum((f(al) - f(nl)) ** 2, axis=0)
    alpha = l_an - l_ap
    return jnp.mean(jax.nn.relu(d_pos - d_neg_a + margin * alpha))


if __name__ == "__main__":
    # Small, non-multiple-of-(8, 128) shapes: exercises the ragged B mask,
    # ragged D writeback clipping, and a >=2-block parallel D axis.
    B, D = 20, 300
    key = jax.random.PRNGKey(0)
    keys = jax.random.split(key, 6)
    anchor = jax.random.normal(keys[0], (B, D), dtype=jnp.float32)
    positive = jax.random.normal(keys[1], (B, D), dtype=jnp.float32)
    negative = jax.random.normal(keys[2], (B, D), dtype=jnp.float32)
    anchor_label = jax.random.normal(keys[3], (B, D), dtype=jnp.float32)
    positive_label = jax.random.normal(keys[4], (B, D), dtype=jnp.float32)
    negative_label = jax.random.normal(keys[5], (B, D), dtype=jnp.float32)

    ref = _reference(anchor, positive, negative,
                     anchor_label, positive_label, negative_label)

    # Small tiles force a (3, 3) grid: accumulator init/finalize, the ragged-B
    # mask branch, and multiple parallel D blocks are all exercised.
    out = jax.block_until_ready(
        triplet_loss_self(anchor, positive, negative,
                          anchor_label, positive_label, negative_label,
                          tile_b=8, tile_d=128))
    assert jnp.allclose(out, ref, rtol=1e-5, atol=1e-5), (out, ref)

    # Default (large-tile) configuration.
    out2 = jax.block_until_ready(
        triplet_loss_self(anchor, positive, negative,
                          anchor_label, positive_label, negative_label))
    assert jnp.allclose(out2, ref, rtol=1e-5, atol=1e-5), (out2, ref)

    print("KERNEL_OK")
</pallas_src>

<mosaic_0001>
module attributes {stable_mosaic.version = 11 : i64} {
  func.func @_triplet_kernel(%arg0: i32, %arg1: i32, %arg2: memref<8x128xf32, #tpu.memory_space<vmem>>, %arg3: memref<8x128xf32, #tpu.memory_space<vmem>>, %arg4: memref<8x128xf32, #tpu.memory_space<vmem>>, %arg5: memref<8x128xf32, #tpu.memory_space<vmem>>, %arg6: memref<8x128xf32, #tpu.memory_space<vmem>>, %arg7: memref<8x128xf32, #tpu.memory_space<vmem>>, %arg8: memref<1x128xf32, #tpu.memory_space<vmem>>, %arg9: memref<8x128xf32, #tpu.memory_space<vmem>>) attributes {dimension_semantics = [#tpu.dimension_semantics<parallel>, #tpu.dimension_semantics<arbitrary>], iteration_bounds = array<i64: 3, 3>, scalar_prefetch = 0 : i64, scratch_operands = 1 : i64, tpu.core_type = #tpu.core_type<tc>, window_params = [{transform_indices = @transform_0, window_bounds = array<i64: 8, 128>}, {transform_indices = @transform_1, window_bounds = array<i64: 8, 128>}, {transform_indices = @transform_2, window_bounds = array<i64: 8, 128>}, {transform_indices = @transform_3, window_bounds = array<i64: 8, 128>}, {transform_indices = @transform_4, window_bounds = array<i64: 8, 128>}, {transform_indices = @transform_5, window_bounds = array<i64: 8, 128>}, {transform_indices = @transform_6, window_bounds = array<i64: 1, 128>}]} {
    %c0_i32 = arith.constant 0 : i32
    %0 = arith.cmpi eq, %arg1, %c0_i32 : i32
    %1 = arith.extui %0 : i1 to i32
    %c0_i32_0 = arith.constant 0 : i32
    %2 = arith.cmpi ne, %1, %c0_i32_0 : i32
    scf.if %2 {
      %cst_16 = arith.constant 0.000000e+00 : f32
      %31 = vector.broadcast %cst_16 : f32 to vector<8x128xf32>
      %c0_17 = arith.constant 0 : index
      %c0_18 = arith.constant 0 : index
      %32 = vector.load %arg9[%c0_17, %c0_18] : memref<8x128xf32, #tpu.memory_space<vmem>>, vector<8x128xf32>
      tpu.vector_store %arg9[%c0_17, %c0_18], %31 {strides = array<i32>} : memref<8x128xf32, #tpu.memory_space<vmem>>, vector<8x128xf32>,
    } else {
    }
    %c0 = arith.constant 0 : index
    %c0_1 = arith.constant 0 : index
    %3 = vector.load %arg2[%c0, %c0_1] : memref<8x128xf32, #tpu.memory_space<vmem>>, vector<8x128xf32>
    %c0_2 = arith.constant 0 : index
    %c0_3 = arith.constant 0 : index
    %4 = vector.load %arg3[%c0_2, %c0_3] : memref<8x128xf32, #tpu.memory_space<vmem>>, vector<8x128xf32>
    %c0_4 = arith.constant 0 : index
    %c0_5 = arith.constant 0 : index
    %5 = vector.load %arg4[%c0_4, %c0_5] : memref<8x128xf32, #tpu.memory_space<vmem>>, vector<8x128xf32>
    %c0_6 = arith.constant 0 : index
    %c0_7 = arith.constant 0 : index
    %6 = vector.load %arg5[%c0_6, %c0_7] : memref<8x128xf32, #tpu.memory_space<vmem>>, vector<8x128xf32>
    %c0_8 = arith.constant 0 : index
    %c0_9 = arith.constant 0 : index
    %7 = vector.load %arg6[%c0_8, %c0_9] : memref<8x128xf32, #tpu.memory_space<vmem>>, vector<8x128xf32>
    %c0_10 = arith.constant 0 : index
    %c0_11 = arith.constant 0 : index
    %8 = vector.load %arg7[%c0_10, %c0_11] : memref<8x128xf32, #tpu.memory_space<vmem>>, vector<8x128xf32>
    %9 = arith.subf %3, %4 : vector<8x128xf32>
    %10 = arith.subf %3, %5 : vector<8x128xf32>
    %11 = arith.subf %6, %7 : vector<8x128xf32>
    %12 = arith.subf %6, %8 : vector<8x128xf32>
    %13 = arith.mulf %9, %9 : vector<8x128xf32>
    %14 = arith.mulf %10, %10 : vector<8x128xf32>
    %15 = arith.subf %13, %14 : vector<8x128xf32>
    %16 = arith.mulf %12, %12 : vector<8x128xf32>
    %17 = arith.mulf %11, %11 : vector<8x128xf32>
    %18 = arith.subf %16, %17 : vector<8x128xf32>
    %cst = arith.constant 5.000000e-01 : f32
    %19 = vector.broadcast %cst : f32 to vector<8x128xf32>
    %20 = arith.mulf %19, %18 : vector<8x128xf32>
    %21 = arith.addf %15, %20 : vector<8x128xf32>
    %c2_i32 = arith.constant 2 : i32
    %22 = arith.cmpi eq, %arg1, %c2_i32 : i32
    %true = arith.constant true
    %23 = arith.xori %22, %true : i1
    %24 = arith.extui %23 : i1 to i32
    %c0_i32_12 = arith.constant 0 : i32
    %25 = arith.cmpi ne, %24, %c0_i32_12 : i32
    scf.if %25 {
      %c0_16 = arith.constant 0 : index
      %c0_17 = arith.constant 0 : index
      %31 = vector.load %arg9[%c0_16, %c0_17] : memref<8x128xf32, #tpu.memory_space<vmem>>, vector<8x128xf32>
      %32 = arith.addf %31, %21 : vector<8x128xf32>
      %c0_18 = arith.constant 0 : index
      %c0_19 = arith.constant 0 : index
      %33 = vector.load %arg9[%c0_18, %c0_19] : memref<8x128xf32, #tpu.memory_space<vmem>>, vector<8x128xf32>
      tpu.vector_store %arg9[%c0_18, %c0_19], %32 {strides = array<i32>} : memref<8x128xf32, #tpu.memory_space<vmem>>, vector<8x128xf32>,
    } else {
    }
    %26 = arith.extui %22 : i1 to i32
    %c0_i32_13 = arith.constant 0 : i32
    %27 = arith.cmpi ne, %26, %c0_i32_13 : i32
    scf.if %27 {
      %31 = tpu.iota {dimensions = array<i32: 0>} : vector<8x128xi32>
      %c4_i32 = arith.constant 4 : i32
      %32 = vector.broadcast %c4_i32 : i32 to vector<8x128xi32>
      %33 = arith.cmpi slt, %31, %32 : vector<8x128xi32>
      %cst_16 = arith.constant 0.000000e+00 : f32
      %34 = vector.broadcast %cst_16 : f32 to vector<8x128xf32>
      %35 = arith.select %33, %21, %34 : vector<8x128xi1>, vector<8x128xf32>
      %c0_17 = arith.constant 0 : index
      %c0_18 = arith.constant 0 : index
      %36 = vector.load %arg9[%c0_17, %c0_18] : memref<8x128xf32, #tpu.memory_space<vmem>>, vector<8x128xf32>
      %37 = arith.addf %36, %35 : vector<8x128xf32>
      %c0_19 = arith.constant 0 : index
      %c0_20 = arith.constant 0 : index
      %38 = vector.load %arg9[%c0_19, %c0_20] : memref<8x128xf32, #tpu.memory_space<vmem>>, vector<8x128xf32>
      tpu.vector_store %arg9[%c0_19, %c0_20], %37 {strides = array<i32>} : memref<8x128xf32, #tpu.memory_space<vmem>>, vector<8x128xf32>,
    } else {
    }
    %c2_i32_14 = arith.constant 2 : i32
    %28 = arith.cmpi eq, %arg1, %c2_i32_14 : i32
    %29 = arith.extui %28 : i1 to i32
    %c0_i32_15 = arith.constant 0 : i32
    %30 = arith.cmpi ne, %29, %c0_i32_15 : i32
    scf.if %30 {
      %c0_16 = arith.constant 0 : index
      %c0_17 = arith.constant 0 : index
      %31 = vector.load %arg9[%c0_16, %c0_17] : memref<8x128xf32, #tpu.memory_space<vmem>>, vector<8x128xf32>
      %cst_18 = arith.constant dense<0.000000e+00> : vector<128xf32>
      %32 = vector.multi_reduction <add>, %31, %cst_18 [0] : vector<8x128xf32> to vector<128xf32>
      %33 = vector.shape_cast %32 : vector<128xf32> to vector<1x128xf32>
      %cst_19 = arith.constant 0.000000e+00 : f32
      %34 = vector.broadcast %cst_19 : f32 to vector<1x128xf32>
      %35 = arith.maximumf %33, %34 : vector<1x128xf32>
      %c0_20 = arith.constant 0 : index
      %c0_21 = arith.constant 0 : index
      %36 = vector.load %arg8[%c0_20, %c0_21] : memref<1x128xf32, #tpu.memory_space<vmem>>, vector<1x128xf32>
      tpu.vector_store %arg8[%c0_20, %c0_21], %35 {strides = array<i32>} : memref<1x128xf32, #tpu.memory_space<vmem>>, vector<1x128xf32>,
    } else {
    }
    return
  }
  func.func @transform_0(%arg0: i32, %arg1: i32) -> (i32, i32) {
    %c0_i32 = arith.constant 0 : i32
    return %arg1, %arg0 : i32, i32
  }
  func.func @transform_1(%arg0: i32, %arg1: i32) -> (i32, i32) {
    %c0_i32 = arith.constant 0 : i32
    return %arg1, %arg0 : i32, i32
  }
  func.func @transform_2(%arg0: i32, %arg1: i32) -> (i32, i32) {
    %c0_i32 = arith.constant 0 : i32
    return %arg1, %arg0 : i32, i32
  }
  func.func @transform_3(%arg0: i32, %arg1: i32) -> (i32, i32) {
    %c0_i32 = arith.constant 0 : i32
    return %arg1, %arg0 : i32, i32
  }
  func.func @transform_4(%arg0: i32, %arg1: i32) -> (i32, i32) {
    %c0_i32 = arith.constant 0 : i32
    return %arg1, %arg0 : i32, i32
  }
  func.func @transform_5(%arg0: i32, %arg1: i32) -> (i32, i32) {
    %c0_i32 = arith.constant 0 : i32
    return %arg1, %arg0 : i32, i32
  }
  func.func @transform_6(%arg0: i32, %arg1: i32) -> (i32, i32) {
    %c0_i32 = arith.constant 0 : i32
    %c0_i32_0 = arith.constant 0 : i32
    return %c0_i32, %arg0 : i32, i32
  }
}

</mosaic_0001>

<llo_original>
// kernel: tpu_custom_call.1
$region0: #{tpu_custom_call.1}
  #allocation0 [shape = 'u32[]', space=smem, size = 0x4, offset = 0x4, fixed_abs, tag = 'smem constant byte address 0x4 - core index']
  #allocation1 [shape = 'u32[144,128]{1,0:T(1,128)}', space=vmem, size = 0x12000, scoped, tag = 'internal scratch']
  #allocation2 [shape = 'f32[8,128]{1,0:T(8,128)}', space=vmem, size = 0x1000, scoped, tag = 'scratch operand']
  %s0 = inlined_call_operand.hbm [shape: f32[20,300], index: 0, kind: input, shape index: {}]
  %s1 = inlined_call_operand.hbm [shape: f32[20,300], index: 1, kind: input, shape index: {}]
  %s2 = inlined_call_operand.hbm [shape: f32[20,300], index: 2, kind: input, shape index: {}]
  %s3 = inlined_call_operand.hbm [shape: f32[20,300], index: 3, kind: input, shape index: {}]
  %s4 = inlined_call_operand.hbm [shape: f32[20,300], index: 4, kind: input, shape index: {}]
  %s5 = inlined_call_operand.hbm [shape: f32[20,300], index: 5, kind: input, shape index: {}]
  %s6 = inlined_call_operand.hbm [shape: f32[1,300], index: 6, kind: output, shape index: {}]
  %s7 = sld [smem:[#allocation0]]
  $region93: #{tpu_custom_call.1} parent=0
    _
  %s9 = ssub.s32 1, %s7
  %s10 = scalar_select 0, %s9, %s7
  $region1: #{tpu_custom_call.1} parent=0
    #allocation3 [shape = 'u8[8192]{0}', space=vmem, size = 0x2000, scoped, tag = 'input window, operand 0']
    #allocation4 [shape = 's32[2]{0}', space=sflag, size = 0x8, scoped, tag = 'scoped memory for tpu_custom_call.1']
    #allocation5 [shape = 's32[2]{0}', space=sflag, size = 0x8, scoped, tag = 'scoped memory for tpu_custom_call.1']
    #allocation6 [shape = 'u8[8192]{0}', space=vmem, size = 0x2000, scoped, tag = 'input window, operand 1']
    #allocation7 [shape = 's32[2]{0}', space=sflag, size = 0x8, scoped, tag = 'scoped memory for tpu_custom_call.1']
    #allocation8 [shape = 'u8[8192]{0}', space=vmem, size = 0x2000, scoped, tag = 'input window, operand 2']
    #allocation9 [shape = 'u8[8192]{0}', space=vmem, size = 0x2000, scoped, tag = 'input window, operand 3']
    #allocation10 [shape = 's32[2]{0}', space=sflag, size = 0x8, scoped, tag = 'scoped memory for tpu_custom_call.1']
    #allocation11 [shape = 'u8[8192]{0}', space=vmem, size = 0x2000, scoped, tag = 'input window, operand 4']
    #allocation12 [shape = 'u8[8192]{0}', space=vmem, size = 0x2000, scoped, tag = 'input window, operand 5']
    #allocation13 [shape = 's32[2]{0}', space=sflag, size = 0x8, scoped, tag = 'scoped memory for tpu_custom_call.1']
    #allocation14 [shape = 'u8[1024]{0}', space=vmem, size = 0x400, scoped, tag = 'output window, operand 0']
    %11 = vsyncpa [#allocation4], 0
    %s12 = scalar_lea.sflag [#allocation4], 1
    %13 = vsyncpa %s12, 0
    %14 = vsyncpa [#allocation7], 0
    %s15 = scalar_lea.sflag [#allocation7], 1
    %16 = vsyncpa %s15, 0
    %17 = vsyncpa [#allocation10], 0
    %s18 = scalar_lea.sflag [#allocation10], 1
    %19 = vsyncpa %s18, 0
    %20 = vsyncpa [#allocation13], 0
    %s21 = scalar_lea.sflag [#allocation13], 1
    %22 = vsyncpa %s21, 0
    %23 = vsyncpa [#allocation5], 0
    %s24 = scalar_lea.sflag [#allocation5], 1
    %25 = vsyncpa %s24, 0
    loop: start=0, step=1, limit=11
    $region2: #{tpu_custom_call.1} parent=1 // loop_pre_header
      _
    $region3: #{tpu_custom_call.1} parent=1 // loop_header
      %s27 = sphi 0, %s31
      %p28 = scmp.ge.s32.totalorder %s27, 11
      %s34 = sphi 0, %s46
      %s35 = sphi 0, %s42
      %s36 = sphi 0, %s34
      %s37 = sphi 0, %s35
      %s38 = sphi 0, %s36
      %s39 = sphi 0, %s37
      %s51 = sphi 0, %s53
      %s54 = sphi 0, %s51
      %s55 = sphi 0, %s54
      %s71 = sphi 0, %s55
      %s79 = sphi 0, %s81
      %s82 = sphi 0, %s79
      %s83 = sphi 0, %s82
      %s99 = sphi 0, %s83
      %s107 = sphi 0, %s109
      %s110 = sphi 0, %s107
      %s111 = sphi 0, %s110
      %s127 = sphi 0, %s111
      %s135 = sphi 0, %s137
      %s138 = sphi 0, %s135
      %s139 = sphi 0, %s138
      %s155 = sphi 0, %s139
      %s163 = sphi 0, %s165
      %s166 = sphi 0, %s163
      %s167 = sphi 0, %s166
      %s183 = sphi 0, %s167
      %s191 = sphi 0, %s193
      %s194 = sphi 0, %s191
      %s195 = sphi 0, %s194
      %s211 = sphi 0, %s195
      %s217 = sphi 0, %s219
      %s220 = sphi 0, %s217
      %s221 = sphi 0, %s220
      %s237 = sphi 0, %s221
    $region4: #{tpu_custom_call.1} parent=1 // loop_header_branch
      %30 = sbr.rel (%p28) target = $region8
    $region5: #{tpu_custom_call.1} parent=1 // loop_body
      %s32 = ssub.s32 %s27, 1
      %s33 = ssub.s32 %s27, 2
      %s40 = sadd.s32 1, %s35
      %p41 = scmp.ge.s32.totalorder %s40, 3
      %s42 = scalar_select %p41, 0, %s40
      %s43 = sadd.s32 1, %s34
      %s44 = scalar_select %p41, %s43, %s34
      %p45 = scmp.ge.s32.totalorder %s44, 3
      %s46 = scalar_select %p45, 0, %s44
      %s47 = ssub.s32 %s35, %s42
      %s48 = ssub.s32 %s34, %s46
      %s49 = sor.u32 %s47, %s48
      %p50 = scmp.eq.s32.totalorder %s49, 0
      %s52 = sadd.s32 %s51, 1
      %s53 = scalar_select %p50, %s51, %s52
      %p56 = pneg %p50
      %p57 = scmp.eq.s32.totalorder %s27, 8
      %p58 = por %p56, %p57
      %p59 = scmp.ne.s32.totalorder %s51, %s54
      %p60 = scmp.eq.s32.totalorder %s27, 0
      %p61 = por %p59, %p60
      %p62 = scmp.ne.s32.totalorder %s51, %s54
      %p63 = scmp.eq.s32.totalorder %s32, 8
      %p64 = por %p62, %p63
      %p65 = scmp.ne.s32.totalorder %s54, %s55
      %p66 = scmp.eq.s32.totalorder %s32, 0
      %p67 = por %p65, %p66
      %p68 = scmp.ne.s32.totalorder %s54, %s55
      %p69 = scmp.eq.s32.totalorder %s33, 8
      %p70 = por %p68, %p69
      %p72 = scmp.ne.s32.totalorder %s55, %s71
      %p73 = scmp.eq.s32.totalorder %s33, 0
      %p74 = por %p72, %p73
      %s75 = ssub.s32 %s35, %s42
      %s76 = ssub.s32 %s34, %s46
      %s77 = sor.u32 %s75, %s76
      %p78 = scmp.eq.s32.totalorder %s77, 0
      %s80 = sadd.s32 %s79, 1
      %s81 = scalar_select %p78, %s79, %s80
      %p84 = pneg %p78
      %p85 = scmp.eq.s32.totalorder %s27, 8
      %p86 = por %p84, %p85
      %p87 = scmp.ne.s32.totalorder %s79, %s82
      %p88 = scmp.eq.s32.totalorder %s27, 0
      %p89 = por %p87, %p88
      %p90 = scmp.ne.s32.totalorder %s79, %s82
      %p91 = scmp.eq.s32.totalorder %s32, 8
      %p92 = por %p90, %p91
      %p93 = scmp.ne.s32.totalorder %s82, %s83
      %p94 = scmp.eq.s32.totalorder %s32, 0
      %p95 = por %p93, %p94
      %p96 = scmp.ne.s32.totalorder %s82, %s83
      %p97 = scmp.eq.s32.totalorder %s33, 8
      %p98 = por %p96, %p97
      %p100 = scmp.ne.s32.totalorder %s83, %s99
      %p101 = scmp.eq.s32.totalorder %s33, 0
      %p102 = por %p100, %p101
      %s103 = ssub.s32 %s35, %s42
      %s104 = ssub.s32 %s34, %s46
      %s105 = sor.u32 %s103, %s104
      %p106 = scmp.eq.s32.totalorder %s105, 0
      %s108 = sadd.s32 %s107, 1
      %s109 = scalar_select %p106, %s107, %s108
      %p112 = pneg %p106
      %p113 = scmp.eq.s32.totalorder %s27, 8
      %p114 = por %p112, %p113
      %p115 = scmp.ne.s32.totalorder %s107, %s110
      %p116 = scmp.eq.s32.totalorder %s27, 0
      %p117 = por %p115, %p116
      %p118 = scmp.ne.s32.totalorder %s107, %s110
      %p119 = scmp.eq.s32.totalorder %s32, 8
      %p120 = por %p118, %p119
      %p121 = scmp.ne.s32.totalorder %s110, %s111
      %p122 = scmp.eq.s32.totalorder %s32, 0
      %p123 = por %p121, %p122
      %p124 = scmp.ne.s32.totalorder %s110, %s111
      %p125 = scmp.eq.s32.totalorder %s33, 8
      %p126 = por %p124, %p125
      %p128 = scmp.ne.s32.totalorder %s111, %s127
      %p129 = scmp.eq.s32.totalorder %s33, 0
      %p130 = por %p128, %p129
      %s131 = ssub.s32 %s35, %s42
      %s132 = ssub.s32 %s34, %s46
      %s133 = sor.u32 %s131, %s132
      %p134 = scmp.eq.s32.totalorder %s133, 0
      %s136 = sadd.s32 %s135, 1
      %s137 = scalar_select %p134, %s135, %s136
      %p140 = pneg %p134
      %p141 = scmp.eq.s32.totalorder %s27, 8
      %p142 = por %p140, %p141
      %p143 = scmp.ne.s32.totalorder %s135, %s138
      %p144 = scmp.eq.s32.totalorder %s27, 0
      %p145 = por %p143, %p144
      %p146 = scmp.ne.s32.totalorder %s135, %s138
      %p147 = scmp.eq.s32.totalorder %s32, 8
      %p148 = por %p146, %p147
      %p149 = scmp.ne.s32.totalorder %s138, %s139
      %p150 = scmp.eq.s32.totalorder %s32, 0
      %p151 = por %p149, %p150
      %p152 = scmp.ne.s32.totalorder %s138, %s139
      %p153 = scmp.eq.s32.totalorder %s33, 8
      %p154 = por %p152, %p153
      %p156 = scmp.ne.s32.totalorder %s139, %s155
      %p157 = scmp.eq.s32.totalorder %s33, 0
      %p158 = por %p156, %p157
      %s159 = ssub.s32 %s35, %s42
      %s160 = ssub.s32 %s34, %s46
      %s161 = sor.u32 %s159, %s160
      %p162 = scmp.eq.s32.totalorder %s161, 0
      %s164 = sadd.s32 %s163, 1
      %s165 = scalar_select %p162, %s163, %s164
      %p168 = pneg %p162
      %p169 = scmp.eq.s32.totalorder %s27, 8
      %p170 = por %p168, %p169
      %p171 = scmp.ne.s32.totalorder %s163, %s166
      %p172 = scmp.eq.s32.totalorder %s27, 0
      %p173 = por %p171, %p172
      %p174 = scmp.ne.s32.totalorder %s163, %s166
      %p175 = scmp.eq.s32.totalorder %s32, 8
      %p176 = por %p174, %p175
      %p177 = scmp.ne.s32.totalorder %s166, %s167
      %p178 = scmp.eq.s32.totalorder %s32, 0
      %p179 = por %p177, %p178
      %p180 = scmp.ne.s32.totalorder %s166, %s167
      %p181 = scmp.eq.s32.totalorder %s33, 8
      %p182 = por %p180, %p181
      %p184 = scmp.ne.s32.totalorder %s167, %s183
      %p185 = scmp.eq.s32.totalorder %s33, 0
      %p186 = por %p184, %p185
      %s187 = ssub.s32 %s35, %s42
      %s188 = ssub.s32 %s34, %s46
      %s189 = sor.u32 %s187, %s188
      %p190 = scmp.eq.s32.totalorder %s189, 0
      %s192 = sadd.s32 %s191, 1
      %s193 = scalar_select %p190, %s191, %s192
      %p196 = pneg %p190
      %p197 = scmp.eq.s32.totalorder %s27, 8
      %p198 = por %p196, %p197
      %p199 = scmp.ne.s32.totalorder %s191, %s194
      %p200 = scmp.eq.s32.totalorder %s27, 0
      %p201 = por %p199, %p200
      %p202 = scmp.ne.s32.totalorder %s191, %s194
      %p203 = scmp.eq.s32.totalorder %s32, 8
      %p204 = por %p202, %p203
      %p205 = scmp.ne.s32.totalorder %s194, %s195
      %p206 = scmp.eq.s32.totalorder %s32, 0
      %p207 = por %p205, %p206
      %p208 = scmp.ne.s32.totalorder %s194, %s195
      %p209 = scmp.eq.s32.totalorder %s33, 8
      %p210 = por %p208, %p209
      %p212 = scmp.ne.s32.totalorder %s195, %s211
      %p213 = scmp.eq.s32.totalorder %s33, 0
      %p214 = por %p212, %p213
      %s215 = ssub.s32 %s34, %s46
      %p216 = scmp.eq.s32.totalorder %s215, 0
      %s218 = sadd.s32 %s217, 1
      %s219 = scalar_select %p216, %s217, %s218
      %p222 = pneg %p216
      %p223 = scmp.eq.s32.totalorder %s27, 8
      %p224 = por %p222, %p223
      %p225 = scmp.ne.s32.totalorder %s217, %s220
      %p226 = scmp.eq.s32.totalorder %s27, 0
      %p227 = por %p225, %p226
      %p228 = scmp.ne.s32.totalorder %s217, %s220
      %p229 = scmp.eq.s32.totalorder %s32, 8
      %p230 = por %p228, %p229
      %p231 = scmp.ne.s32.totalorder %s220, %s221
      %p232 = scmp.eq.s32.totalorder %s32, 0
      %p233 = por %p231, %p232
      %p234 = scmp.ne.s32.totalorder %s220, %s221
      %p235 = scmp.eq.s32.totalorder %s33, 8
      %p236 = por %p234, %p235
      %p238 = scmp.ne.s32.totalorder %s221, %s237
      %p239 = scmp.eq.s32.totalorder %s33, 0
      %p240 = por %p238, %p239
      %p241 = scmp.le.s32.totalorder 1, %s27
      %p242 = scmp.lt.s32.totalorder %s27, 10
      %p243 = pnand %p241, %p242
      %p244 = pneg %p243
      // Predicated region
      $region9: #{tpu_custom_call.1} parent=5 // pred_check
        _
      $region10: #{tpu_custom_call.1} parent=5 // pred_check_branch
        %246 = sbr.rel (%p243) target = $region12
      $region11: #{tpu_custom_call.1} parent=5 // pred_region
        %s247 = ssub.s32 %s27, 1
      $region12: #{tpu_custom_call.1} parent=5 // pred_fallthru
        _
      %p248 = scmp.lt.s32.totalorder %s27, 9
      // Predicated region
      $region13: #{tpu_custom_call.1} parent=5 // pred_check
        %p249 = pneg %p248
      $region14: #{tpu_custom_call.1} parent=5 // pred_check_branch
        %251 = sbr.rel (%p249) target = $region16
      $region15: #{tpu_custom_call.1} parent=5 // pred_region
        // Predicated region
        $region17: #{tpu_custom_call.1} parent=15 // pred_check
          %p252 = pneg %p61
        $region18: #{tpu_custom_call.1} parent=15 // pred_check_branch
          %254 = sbr.rel (%p252) target = $region20
        $region19: #{tpu_custom_call.1} parent=15 // pred_region
          %s255 = sand.u32 %s51, 1
          %s256 = scalar_lea.sflag [#allocation4], %s255
          %s257 = sand.u32 %s51, 1
          %s258 = smul.addr %s257, 8
          %s259 = scalar_lea.vmem [#allocation3], %s258
          %s261 = ssub.s32 128, 128
          %262 = vsyncadd %s256, %s261
          %s263 = smul.addr %s35, 3
          %s264 = sadd.s32 %s34, %s263
          %s265 = smul.addr %s264, 128
          %s266 = scalar_lea.hbm %s0, %s265
          %s268 = sshll.u32 %s259, 4
          %s269 = int_to_ptr.vmem [resolvable:$true] %s268
          %271 = dma.hbm_to_vmem [thread:$0]  %s266, 128, %s269, %s256
        $region20: #{tpu_custom_call.1} parent=15 // pred_fallthru
          _
        // Predicated region
        $region21: #{tpu_custom_call.1} parent=15 // pred_check
          %p272 = pneg %p89
        $region22: #{tpu_custom_call.1} parent=15 // pred_check_branch
          %274 = sbr.rel (%p272) target = $region24
        $region23: #{tpu_custom_call.1} parent=15 // pred_region
          %s275 = sand.u32 %s27, 1
          %s276 = scalar_lea.sflag [#allocation7], %s275
          %s277 = sand.u32 %s79, 1
          %s278 = smul.addr %s277, 8
          %s279 = scalar_lea.vmem [#allocation6], %s278
          %s281 = ssub.s32 128, 128
          %282 = vsyncadd %s276, %s281
          %s283 = smul.addr %s35, 3
          %s284 = sadd.s32 %s34, %s283
          %s285 = smul.addr %s284, 128
          %s286 = scalar_lea.hbm %s1, %s285
          %s288 = sshll.u32 %s279, 4
          %s289 = int_to_ptr.vmem [resolvable:$true] %s288
          %291 = dma.hbm_to_vmem [thread:$0]  %s286, 128, %s289, %s276
        $region24: #{tpu_custom_call.1} parent=15 // pred_fallthru
          _
        // Predicated region
        $region25: #{tpu_custom_call.1} parent=15 // pred_check
          %p292 = pneg %p117
        $region26: #{tpu_custom_call.1} parent=15 // pred_check_branch
          %294 = sbr.rel (%p292) target = $region28
        $region27: #{tpu_custom_call.1} parent=15 // pred_region
          %s295 = sand.u32 %s27, 1
          %s296 = scalar_lea.sflag [#allocation7], %s295
          %s297 = sand.u32 %s107, 1
          %s298 = smul.addr %s297, 8
          %s299 = scalar_lea.vmem [#allocation8], %s298
          %s301 = ssub.s32 128, 128
          %302 = vsyncadd %s296, %s301
          %s303 = smul.addr %s35, 3
          %s304 = sadd.s32 %s34, %s303
          %s305 = smul.addr %s304, 128
          %s306 = scalar_lea.hbm %s2, %s305
          %s308 = sshll.u32 %s299, 4
          %s309 = int_to_ptr.vmem [resolvable:$true] %s308
          %311 = dma.hbm_to_vmem [thread:$0]  %s306, 128, %s309, %s296
        $region28: #{tpu_custom_call.1} parent=15 // pred_fallthru
          _
        // Predicated region
        $region29: #{tpu_custom_call.1} parent=15 // pred_check
          %p312 = pneg %p145
        $region30: #{tpu_custom_call.1} parent=15 // pred_check_branch
          %314 = sbr.rel (%p312) target = $region32
        $region31: #{tpu_custom_call.1} parent=15 // pred_region
          %s315 = sand.u32 %s27, 1
          %s316 = scalar_lea.sflag [#allocation10], %s315
          %s317 = sand.u32 %s135, 1
          %s318 = smul.addr %s317, 8
          %s319 = scalar_lea.vmem [#allocation9], %s318
          %s321 = ssub.s32 128, 128
          %322 = vsyncadd %s316, %s321
          %s323 = smul.addr %s35, 3
          %s324 = sadd.s32 %s34, %s323
          %s325 = smul.addr %s324, 128
          %s326 = scalar_lea.hbm %s3, %s325
          %s328 = sshll.u32 %s319, 4
          %s329 = int_to_ptr.vmem [resolvable:$true] %s328
          %331 = dma.hbm_to_vmem [thread:$0]  %s326, 128, %s329, %s316
        $region32: #{tpu_custom_call.1} parent=15 // pred_fallthru
          _
        // Predicated region
        $region33: #{tpu_custom_call.1} parent=15 // pred_check
          %p332 = pneg %p173
        $region34: #{tpu_custom_call.1} parent=15 // pred_check_branch
          %334 = sbr.rel (%p332) target = $region36
        $region35: #{tpu_custom_call.1} parent=15 // pred_region
          %s335 = sand.u32 %s27, 1
          %s336 = scalar_lea.sflag [#allocation10], %s335
          %s337 = sand.u32 %s163, 1
          %s338 = smul.addr %s337, 8
          %s339 = scalar_lea.vmem [#allocation11], %s338
          %s341 = ssub.s32 128, 128
          %342 = vsyncadd %s336, %s341
          %s343 = smul.addr %s35, 3
          %s344 = sadd.s32 %s34, %s343
          %s345 = smul.addr %s344, 128
          %s346 = scalar_lea.hbm %s4, %s345
          %s348 = sshll.u32 %s339, 4
          %s349 = int_to_ptr.vmem [resolvable:$true] %s348
          %351 = dma.hbm_to_vmem [thread:$0]  %s346, 128, %s349, %s336
        $region36: #{tpu_custom_call.1} parent=15 // pred_fallthru
          _
        // Predicated region
        $region37: #{tpu_custom_call.1} parent=15 // pred_check
          %p352 = pneg %p201
        $region38: #{tpu_custom_call.1} parent=15 // pred_check_branch
          %354 = sbr.rel (%p352) target = $region40
        $region39: #{tpu_custom_call.1} parent=15 // pred_region
          %s355 = sand.u32 %s191, 1
          %s356 = scalar_lea.sflag [#allocation13], %s355
          %s357 = sand.u32 %s191, 1
          %s358 = smul.addr %s357, 8
          %s359 = scalar_lea.vmem [#allocation12], %s358
          %s361 = ssub.s32 128, 128
          %362 = vsyncadd %s356, %s361
          %s363 = smul.addr %s35, 3
          %s364 = sadd.s32 %s34, %s363
          %s365 = smul.addr %s364, 128
          %s366 = scalar_lea.hbm %s5, %s365
          %s368 = sshll.u32 %s359, 4
          %s369 = int_to_ptr.vmem [resolvable:$true] %s368
          %371 = dma.hbm_to_vmem [thread:$0]  %s366, 128, %s369, %s356
        $region40: #{tpu_custom_call.1} parent=15 // pred_fallthru
          _
      $region16: #{tpu_custom_call.1} parent=5 // pred_fallthru
        _
      %p372 = scmp.le.s32.totalorder 1, %s27
      %p373 = scmp.lt.s32.totalorder %s27, 10
      %p374 = pnand %p372, %p373
      %p375 = pneg %p374
      // Predicated region
      $region41: #{tpu_custom_call.1} parent=5 // pred_check
        _
      $region42: #{tpu_custom_call.1} parent=5 // pred_check_branch
        %377 = sbr.rel (%p374) target = $region44
      $region43: #{tpu_custom_call.1} parent=5 // pred_region
        %s378 = ssub.s32 %s27, 1
        %s379 = sand.u32 %s54, 1
        %s380 = scalar_lea.sflag [#allocation4], %s379
        %s381 = sand.u32 %s54, 1
        %s382 = smul.addr %s381, 8
        %s383 = scalar_lea.vmem [#allocation3], %s382
        // Predicated region
        $region45: #{tpu_custom_call.1} parent=43 // pred_check
          %p384 = pneg %p67
        $region46: #{tpu_custom_call.1} parent=43 // pred_check_branch
          %386 = sbr.rel (%p384) target = $region48
        $region47: #{tpu_custom_call.1} parent=43 // pred_region
          %387 = dma.done %s380, 128
        $region48: #{tpu_custom_call.1} parent=43 // pred_fallthru
          _
        %s388 = sand.u32 %s32, 1
        %s389 = scalar_lea.sflag [#allocation7], %s388
        %s390 = sand.u32 %s82, 1
        %s391 = smul.addr %s390, 8
        %s392 = scalar_lea.vmem [#allocation6], %s391
        // Predicated region
        $region49: #{tpu_custom_call.1} parent=43 // pred_check
          %p393 = pneg %p95
        $region50: #{tpu_custom_call.1} parent=43 // pred_check_branch
          %395 = sbr.rel (%p393) target = $region52
        $region51: #{tpu_custom_call.1} parent=43 // pred_region
          %396 = dma.done %s389, 128
        $region52: #{tpu_custom_call.1} parent=43 // pred_fallthru
          _
        %s397 = sand.u32 %s32, 1
        %s398 = scalar_lea.sflag [#allocation7], %s397
        %s399 = sand.u32 %s110, 1
        %s400 = smul.addr %s399, 8
        %s401 = scalar_lea.vmem [#allocation8], %s400
        // Predicated region
        $region53: #{tpu_custom_call.1} parent=43 // pred_check
          %p402 = pneg %p123
        $region54: #{tpu_custom_call.1} parent=43 // pred_check_branch
          %404 = sbr.rel (%p402) target = $region56
        $region55: #{tpu_custom_call.1} parent=43 // pred_region
          %405 = dma.done %s398, 128
        $region56: #{tpu_custom_call.1} parent=43 // pred_fallthru
          _
        %s406 = sand.u32 %s32, 1
        %s407 = scalar_lea.sflag [#allocation10], %s406
        %s408 = sand.u32 %s138, 1
        %s409 = smul.addr %s408, 8
        %s410 = scalar_lea.vmem [#allocation9], %s409
        // Predicated region
        $region57: #{tpu_custom_call.1} parent=43 // pred_check
          %p411 = pneg %p151
        $region58: #{tpu_custom_call.1} parent=43 // pred_check_branch
          %413 = sbr.rel (%p411) target = $region60
        $region59: #{tpu_custom_call.1} parent=43 // pred_region
          %414 = dma.done %s407, 128
        $region60: #{tpu_custom_call.1} parent=43 // pred_fallthru
          _
        %s415 = sand.u32 %s32, 1
        %s416 = scalar_lea.sflag [#allocation10], %s415
        %s417 = sand.u32 %s166, 1
        %s418 = smul.addr %s417, 8
        %s419 = scalar_lea.vmem [#allocation11], %s418
        // Predicated region
        $region61: #{tpu_custom_call.1} parent=43 // pred_check
          %p420 = pneg %p179
        $region62: #{tpu_custom_call.1} parent=43 // pred_check_branch
          %422 = sbr.rel (%p420) target = $region64
        $region63: #{tpu_custom_call.1} parent=43 // pred_region
          %423 = dma.done %s416, 128
        $region64: #{tpu_custom_call.1} parent=43 // pred_fallthru
          _
        %s424 = sand.u32 %s194, 1
        %s425 = scalar_lea.sflag [#allocation13], %s424
        %s426 = sand.u32 %s194, 1
        %s427 = smul.addr %s426, 8
        %s428 = scalar_lea.vmem [#allocation12], %s427
        // Predicated region
        $region65: #{tpu_custom_call.1} parent=43 // pred_check
          %p429 = pneg %p207
        $region66: #{tpu_custom_call.1} parent=43 // pred_check_branch
          %431 = sbr.rel (%p429) target = $region68
        $region67: #{tpu_custom_call.1} parent=43 // pred_region
          %432 = dma.done %s425, 128
        $region68: #{tpu_custom_call.1} parent=43 // pred_fallthru
          _
        %s433 = sand.u32 %s54, 1
        %s434 = scalar_lea.sflag [#allocation4], %s433
        %s435 = sand.u32 %s54, 1
        %s436 = smul.addr %s435, 8
        %s437 = scalar_lea.vmem [#allocation3], %s436
        %p438 = pneg %p67
        %p439 = pneg %p64
        %s440 = sand.u32 %s32, 1
        %s441 = scalar_lea.sflag [#allocation7], %s440
        %s442 = sand.u32 %s82, 1
        %s443 = smul.addr %s442, 8
        %s444 = scalar_lea.vmem [#allocation6], %s443
        %p445 = pneg %p95
        %p446 = pneg %p92
        %s447 = sand.u32 %s32, 1
        %s448 = scalar_lea.sflag [#allocation7], %s447
        %s449 = sand.u32 %s110, 1
        %s450 = smul.addr %s449, 8
        %s451 = scalar_lea.vmem [#allocation8], %s450
        %p452 = pneg %p123
        %p453 = pneg %p120
        %s454 = sand.u32 %s32, 1
        %s455 = scalar_lea.sflag [#allocation10], %s454
        %s456 = sand.u32 %s138, 1
        %s457 = smul.addr %s456, 8
        %s458 = scalar_lea.vmem [#allocation9], %s457
        %p459 = pneg %p151
        %p460 = pneg %p148
        %s461 = sand.u32 %s32, 1
        %s462 = scalar_lea.sflag [#allocation10], %s461
        %s463 = sand.u32 %s166, 1
        %s464 = smul.addr %s463, 8
        %s465 = scalar_lea.vmem [#allocation11], %s464
        %p466 = pneg %p179
        %p467 = pneg %p176
        %s468 = sand.u32 %s194, 1
        %s469 = scalar_lea.sflag [#allocation13], %s468
        %s470 = sand.u32 %s194, 1
        %s471 = smul.addr %s470, 8
        %s472 = scalar_lea.vmem [#allocation12], %s471
        %p473 = pneg %p207
        %p474 = pneg %p204
        %p475 = pneg %p233
        %p476 = pneg %p230
        %s477 = sand.u32 %s220, 1
        %s478 = scalar_lea.sflag [#allocation5], %s477
        %s479 = sand.u32 %s220, 1
        %s480 = scalar_lea.vmem [#allocation14], %s479
        %p481 = scmp.eq.s32.totalorder %s37, 0
        // Predicated region
        $region69: #{tpu_custom_call.1} parent=43 // pred_check
          %p482 = pneg %p481
        $region70: #{tpu_custom_call.1} parent=43 // pred_check_branch
          %484 = sbr.rel (%p482) target = $region72
        $region71: #{tpu_custom_call.1} parent=43 // pred_region
          %485 = vst [vmem:[#allocation2] sm:$0xff] 0.0
        $region72: #{tpu_custom_call.1} parent=43 // pred_fallthru
          _
        %v486 = vld [vmem:[%s383] sm:$0xff]
        %v487 = vld [vmem:[%s392] sm:$0xff]
        %v488 = vld [vmem:[%s401] sm:$0xff]
        %v489 = vld [vmem:[%s410] sm:$0xff]
        %v490 = vld [vmem:[%s419] sm:$0xff]
        %v491 = vld [vmem:[%s428] sm:$0xff]
        %v492 = vsub.f32 %v486, %v487
        %v493 = vsub.f32 %v486, %v488
        %v494 = vsub.f32 %v489, %v490
        %v495 = vsub.f32 %v489, %v491
        %v496 = vmul.f32 %v492, %v492
        %v497 = vmul.f32 %v493, %v493
        %v498 = vsub.f32 %v496, %v497
        %v499 = vmul.f32 %v495, %v495
        %v500 = vmul.f32 %v494, %v494
        %v501 = vsub.f32 %v499, %v500
        %v502 = vmul.f32 %v501, 0.5
        %v503 = vadd.f32 %v498, %v502
        %p504 = scmp.eq.s32.totalorder %s37, 2
        %p505 = scmp.ne.s32.totalorder %s37, 2
        // Predicated region
        $region73: #{tpu_custom_call.1} parent=43 // pred_check
          %p506 = pneg %p505
        $region74: #{tpu_custom_call.1} parent=43 // pred_check_branch
          %508 = sbr.rel (%p506) target = $region76
        $region75: #{tpu_custom_call.1} parent=43 // pred_region
          %v509 = vld [vmem:[#allocation2] sm:$0xff]
          %v510 = vadd.f32 %v509, %v503
          %511 = vst [vmem:[#allocation2] sm:$0xff] %v510
        $region76: #{tpu_custom_call.1} parent=43 // pred_fallthru
          _
        // Predicated region
        $region77: #{tpu_custom_call.1} parent=43 // pred_check
          %p512 = pneg %p504
        $region78: #{tpu_custom_call.1} parent=43 // pred_check_branch
          %514 = sbr.rel (%p512) target = $region80
        $region79: #{tpu_custom_call.1} parent=43 // pred_region
          %v515 = vlaneseq
          %v516 = vshrl.u32 %v515, 7
          %vm517 = vcmp.lt.s32.totalorder %v516, 4
          %v518 = vsel %vm517, %v503, 0.0
          %v519 = vld [vmem:[#allocation2] sm:$0xff]
          %v520 = vadd.f32 %v519, %v518
          %521 = vst [vmem:[#allocation2] sm:$0xff] %v520
          %v522 = vld [vmem:[#allocation2] sm:$0xff]
          %v523 = vrot.slane %v522, 4
          %v524 = vadd.f32 %v522, %v523
          %v525 = vrot.slane %v524, 2
          %v526 = vadd.f32 %v524, %v525
          %v527 = vrot.slane %v526, 1
          %v528 = vadd.f32 %v526, %v527
          %v529 = vmax.f32 %v528, 0.0
          %530 = vst [vmem:[%s480] sm:$0x1] %v529
        $region80: #{tpu_custom_call.1} parent=43 // pred_fallthru
          _
        %s531 = sand.u32 %s220, 1
        %s532 = scalar_lea.sflag [#allocation5], %s531
        %s533 = sand.u32 %s220, 1
        %s534 = scalar_lea.vmem [#allocation14], %s533
        // Predicated region
        $region81: #{tpu_custom_call.1} parent=43 // pred_check
          %p535 = pneg %p230
        $region82: #{tpu_custom_call.1} parent=43 // pred_check_branch
          %537 = sbr.rel (%p535) target = $region84
        $region83: #{tpu_custom_call.1} parent=43 // pred_region
          %s539 = ssub.s32 16, 16
          %540 = vsyncadd %s532, %s539
          %s541 = smul.addr %s36, 16
          %s542 = scalar_lea.hbm %s6, %s541
          %s544 = sshll.u32 %s534, 4
          %s545 = int_to_ptr.vmem [resolvable:$true] %s544
          %547 = dma.vmem_to_hbm [thread:$0]  %s545, 16, %s542, %s532
        $region84: #{tpu_custom_call.1} parent=43 // pred_fallthru
          _
      $region44: #{tpu_custom_call.1} parent=5 // pred_fallthru
        _
      %p548 = scmp.le.s32.totalorder 2, %s27
      // Predicated region
      $region85: #{tpu_custom_call.1} parent=5 // pred_check
        %p549 = pneg %p548
      $region86: #{tpu_custom_call.1} parent=5 // pred_check_branch
        %551 = sbr.rel (%p549) target = $region88
      $region87: #{tpu_custom_call.1} parent=5 // pred_region
        %s552 = ssub.s32 %s27, 2
        // Predicated region
        $region89: #{tpu_custom_call.1} parent=87 // pred_check
          %p553 = pneg %p236
        $region90: #{tpu_custom_call.1} parent=87 // pred_check_branch
          %555 = sbr.rel (%p553) target = $region92
        $region91: #{tpu_custom_call.1} parent=87 // pred_region
          %s556 = sand.u32 %s221, 1
          %s557 = scalar_lea.sflag [#allocation5], %s556
          %s558 = sand.u32 %s221, 1
          %s559 = scalar_lea.vmem [#allocation14], %s558
          %560 = dma.done %s557, 16
        $region92: #{tpu_custom_call.1} parent=87 // pred_fallthru
          _
      $region88: #{tpu_custom_call.1} parent=5 // pred_fallthru
        _
    $region6: #{tpu_custom_call.1} parent=1 // loop_footer
      %s31 = sadd.s32 1, %s27
    $region7: #{tpu_custom_call.1} parent=1 // loop_footer_branch
      %26 = sbr.rel target = $region3
    $region8: #{tpu_custom_call.1} parent=1 // loop_exit
      _
    %561 = vsyncpa [#allocation4], 1
    %s562 = scalar_lea.sflag [#allocation4], 1
    %563 = vsyncpa %s562, 1
    %564 = vsyncpa [#allocation7], 1
    %s565 = scalar_lea.sflag [#allocation7], 1
    %566 = vsyncpa %s565, 1
    %567 = vsyncpa [#allocation10], 1
    %s568 = scalar_lea.sflag [#allocation10], 1
    %569 = vsyncpa %s568, 1
    %570 = vsyncpa [#allocation13], 1
    %s571 = scalar_lea.sflag [#allocation13], 1
    %572 = vsyncpa %s571, 1
    %573 = vsyncpa [#allocation5], 1
    %s574 = scalar_lea.sflag [#allocation5], 1
    %575 = vsyncpa %s574, 1

</llo_original>
